<compile_context>
chip_gen: v5e
topology: v5e:2x2
jax: 0.10.0
libtpu: 0.0.40
codegen_flags: <defaults>
</compile_context>

<pallas_src>
import jax
import jax.numpy as jnp
from jax import lax
from jax.experimental import pallas as pl
from jax.experimental.pallas import tpu as pltpu


# ----------------------------- Pallas kernel ------------------------------ #

def _residual_block_kernel(ec_ref, oc_ref, ep_ref, op_ref,
                           w1_ref, w2_ref, b_ref, o_ref):
    """One grid step == one tile of TR pooled output positions (batch folded into lanes).

    ec_ref/oc_ref : (K1,  TR) bf16 -- conv im2col patches for the even / odd MaxPool partner rows.
    ep_ref/op_ref : (Cin, TR) bf16 -- 1x1-proj inputs for the even / odd partner rows.
    w1_ref        : (Cout, K1)  bf16 -- BN1-scale-folded conv weights.
    w2_ref        : (Cout, Cin) bf16 -- BN2-scale-folded proj weights.
    b_ref         : (Cout, 1)   f32  -- summed folded BN shifts (b1 + b2).
    o_ref         : (Cout, TR)  f32  -- pooled + activated output (lane-dense).
    """
    w1 = w1_ref[...]
    w2 = w2_ref[...]

    # conv + residual 1x1 projection, both pooling parities: four small MXU pushes, f32 accumulate.
    ye = (jnp.dot(w1, ec_ref[...], preferred_element_type=jnp.float32)
          + jnp.dot(w2, ep_ref[...], preferred_element_type=jnp.float32))
    yo = (jnp.dot(w1, oc_ref[...], preferred_element_type=jnp.float32)
          + jnp.dot(w2, op_ref[...], preferred_element_type=jnp.float32))

    # MaxPool2d((2,1)) == elementwise max of the parity partners.  The per-channel BN shift and
    # the monotone LeakyReLU commute with the max, so apply them once afterwards.
    y = jnp.maximum(ye, yo) + b_ref[...]
    o_ref[...] = jnp.maximum(y, 0.01 * y).astype(o_ref.dtype)      # LeakyReLU(0.01)


# ------------------------------ JAX wrapper -------------------------------- #

def residual_block_forward(x, params, eps=1e-5):
    """x: [N, Cin, H, W] (NCHW, float32).  Returns [N, Cout, Hp, Wout] (NCHW, float32)."""
    N, Cin, H, W = x.shape
    w_conv = params["conv_w"].astype(jnp.float32)   # (Cout, Cin, 5, 3)
    w_proj = params["proj_w"].astype(jnp.float32)   # (Cout, Cin, 1, 1)
    Cout = w_conv.shape[0]

    kh, kw, sh, dh = 5, 3, 3, 2
    Hout = (H + 2 * 12 - dh * (kh - 1) - 1) // sh + 1    # conv & proj give the same Hout
    Wout = W                                             # conv: W+2-2; proj: W
    Hp = Hout // 2                                       # MaxPool((2,1)) output rows (floor)
    K1 = Cin * kh * kw
    Ktot = K1 + Cin
    R = N * Hp * Wout                                    # pooled positions, batch folded in

    # Channel-first bf16 copy of x (small) so the big patch tensors come out K-major with the
    # batch already inside the lane axis -- no extra transpose pass over the expanded tensor.
    xt = jnp.transpose(x.astype(jnp.bfloat16), (1, 0, 2, 3))       # (Cin, N, H, W)

    # ---- conv im2col patches, built separately per MaxPool parity --------------------------
    # even partner rows h=2t  access padded-input rows 6t+2i with top pad 12
    # odd  partner rows h=2t+1 access padded-input rows 6t+2i with top pad  9
    def conv_patches(pad_top):
        pad_bot = max(0, 6 * (Hp - 1) + dh * (kh - 1) + 1 - H - pad_top)
        xp = jnp.pad(xt, ((0, 0), (0, 0), (pad_top, pad_bot), (1, 1)))
        taps = [xp[:, :, 2 * i: 2 * i + 6 * (Hp - 1) + 1: 6, j: j + Wout]
                for i in range(kh) for j in range(kw)]              # each (Cin, N, Hp, Wout)
        # (Cin, 15, N, Hp, Wout) -> (Cin*15, N*Hp*Wout); order (ci, i, j) == w_conv.reshape order.
        return jnp.stack(taps, axis=1).reshape(K1, R)

    pc_even = conv_patches(12)
    pc_odd = conv_patches(9)

    # ---- 1x1-proj inputs (stride (3,1), pad (8,0)), same parity split ----------------------
    # even rows h=2t  -> original rows 6t-8 (top pad 8);  odd rows h=2t+1 -> 6t-5 (top pad 5)
    def proj_rows(pad_top):
        pad_bot = max(0, 6 * (Hp - 1) + 1 - H - pad_top)
        xp = jnp.pad(xt, ((0, 0), (0, 0), (pad_top, pad_bot), (0, 0)))
        return xp[:, :, 0: 6 * (Hp - 1) + 1: 6, :].reshape(Cin, R)

    pp_even = proj_rows(8)
    pp_odd = proj_rows(5)

    # ---- lane tiling: big lane tiles, padded row count, VMEM-budgeted ----------------------
    LANE = 128
    r128 = ((R + LANE - 1) // LANE) * LANE
    # per-step VMEM ~ 8*(Ktot+Cout)*TR bytes (double-buffered bf16 inputs + f32 output);
    # budget ~12 MiB so it fits comfortably under the 32 MiB limit on every generation (v7x incl.)
    tr_cap = max(LANE, ((12 * 2 ** 20) // (8 * (Ktot + Cout))) // LANE * LANE)
    TR = min(2048, tr_cap, r128)
    if r128 // TR < 2 and r128 >= 2 * LANE:              # >=2 grid steps -> both v7x TensorCores
        TR = max(LANE, (r128 // 2) // LANE * LANE)
    nr = -(-R // TR)                                     # ceil
    Rp = nr * TR
    pad = Rp - R

    def lane_pad(a):
        return jnp.pad(a, ((0, 0), (0, pad))) if pad else a

    pc_even, pc_odd, pp_even, pp_odd = (lane_pad(a) for a in
                                        (pc_even, pc_odd, pp_even, pp_odd))

    # ---- fold eval-mode BatchNorm into weights (scale) and one per-channel shift -----------
    def fold_bn(g, b, m, v):
        s = g / jnp.sqrt(v + eps)
        return s, b - m * s

    s1, b1 = fold_bn(params["bn1_gamma"], params["bn1_beta"],
                     params["bn1_mean"], params["bn1_var"])
    s2, b2 = fold_bn(params["bn2_gamma"], params["bn2_beta"],
                     params["bn2_mean"], params["bn2_var"])
    w1 = (w_conv.reshape(Cout, K1) * s1[:, None]).astype(jnp.bfloat16)   # (Cout, K1)
    w2 = (w_proj.reshape(Cout, Cin) * s2[:, None]).astype(jnp.bfloat16)  # (Cout, Cin)
    b_all = (b1 + b2).reshape(Cout, 1).astype(jnp.float32)               # (Cout, 1)

    grid_spec = pltpu.PrefetchScalarGridSpec(
        num_scalar_prefetch=0,
        grid=(nr,),
        in_specs=[
            pl.BlockSpec((K1, TR), lambda r: (0, r)),
            pl.BlockSpec((K1, TR), lambda r: (0, r)),
            pl.BlockSpec((Cin, TR), lambda r: (0, r)),
            pl.BlockSpec((Cin, TR), lambda r: (0, r)),
            pl.BlockSpec((Cout, K1), lambda r: (0, 0)),
            pl.BlockSpec((Cout, Cin), lambda r: (0, 0)),
            pl.BlockSpec((Cout, 1), lambda r: (0, 0)),
        ],
        out_specs=pl.BlockSpec((Cout, TR), lambda r: (0, r)),
    )

    out = pl.pallas_call(
        _residual_block_kernel,
        out_shape=jax.ShapeDtypeStruct((Cout, Rp), jnp.float32),
        grid_spec=grid_spec,
        compiler_params=pltpu.CompilerParams(
            dimension_semantics=("parallel",),
            vmem_limit_bytes=32 * 1024 * 1024),
    )(pc_even, pc_odd, pp_even, pp_odd, w1, w2, b_all)

    # Padded lanes hold leaky(b) garbage -> dropped here.  Output is small (H shrunk 6x), so the
    # final NCHW transpose is cheap.  (Kernel output could also be bf16 if downstream accepts it.)
    out = out[:, :R].reshape(Cout, N, Hp, Wout)
    return jnp.transpose(out, (1, 0, 2, 3))


# --------------------------- pure-JAX reference ----------------------------- #

def residual_block_reference(x, params, eps=1e-5):
    w_conv = params["conv_w"]
    w_proj = params["proj_w"]
    Cout = w_conv.shape[0]

    y1 = lax.conv_general_dilated(
        x, w_conv, window_strides=(3, 1), padding=((12, 12), (1, 1)),
        rhs_dilation=(2, 1), dimension_numbers=("NCHW", "OIHW", "NCHW"))
    y2 = lax.conv_general_dilated(
        x, w_proj, window_strides=(3, 1), padding=((8, 8), (0, 0)),
        dimension_numbers=("NCHW", "OIHW", "NCHW"))

    def bn(y, g, b, m, v):
        scale = (g / jnp.sqrt(v + eps)).reshape(1, Cout, 1, 1)
        shift = (b - m * g / jnp.sqrt(v + eps)).reshape(1, Cout, 1, 1)
        return y * scale + shift

    y = bn(y1, params["bn1_gamma"], params["bn1_beta"],
           params["bn1_mean"], params["bn1_var"]) + \
        bn(y2, params["bn2_gamma"], params["bn2_beta"],
           params["bn2_mean"], params["bn2_var"])
    y = jnp.where(y >= 0, y, 0.01 * y)
    Hp = y.shape[2] // 2
    return jnp.maximum(y[:, :, 0:2 * Hp:2, :], y[:, :, 1:2 * Hp:2, :])


# --------------------------------- main ------------------------------------ #

if __name__ == "__main__":
    N, Cin, H, W = 2, 4, 16, 16
    Cout = 8

    keys = jax.random.split(jax.random.PRNGKey(0), 12)
    x = jax.random.normal(keys[0], (N, Cin, H, W), dtype=jnp.float32)

    params = {
        "conv_w": jax.random.normal(keys[1], (Cout, Cin, 5, 3), jnp.float32) * 0.1,
        "proj_w": jax.random.normal(keys[2], (Cout, Cin, 1, 1), jnp.float32) * 0.1,
        "bn1_gamma": jax.random.uniform(keys[3], (Cout,), jnp.float32, 0.5, 1.5),
        "bn1_beta": jax.random.normal(keys[4], (Cout,), jnp.float32) * 0.1,
        "bn1_mean": jax.random.normal(keys[5], (Cout,), jnp.float32) * 0.1,
        "bn1_var": jax.random.uniform(keys[6], (Cout,), jnp.float32, 0.5, 1.5),
        "bn2_gamma": jax.random.uniform(keys[7], (Cout,), jnp.float32, 0.5, 1.5),
        "bn2_beta": jax.random.normal(keys[8], (Cout,), jnp.float32) * 0.1,
        "bn2_mean": jax.random.normal(keys[9], (Cout,), jnp.float32) * 0.1,
        "bn2_var": jax.random.uniform(keys[10], (Cout,), jnp.float32, 0.5, 1.5),
    }

    out = jax.jit(residual_block_forward)(x, params)
    out = jax.block_until_ready(out)

    ref = residual_block_reference(x, params)
    assert out.shape == ref.shape, (out.shape, ref.shape)
    # bf16 inputs/weights (f32 accumulate) -> tolerance loosened vs. the pure-f32 reference.
    assert jnp.allclose(out, ref, rtol=5e-2, atol=5e-2), float(jnp.max(jnp.abs(out - ref)))

    print("KERNEL_OK")
</pallas_src>

<mosaic_0001>
module attributes {stable_mosaic.version = 11 : i64} {
  func.func @_residual_block_kernel(%arg0: i32, %arg1: memref<60x128xbf16, #tpu.memory_space<vmem>>, %arg2: memref<60x128xbf16, #tpu.memory_space<vmem>>, %arg3: memref<4x128xbf16, #tpu.memory_space<vmem>>, %arg4: memref<4x128xbf16, #tpu.memory_space<vmem>>, %arg5: memref<8x60xbf16, #tpu.memory_space<vmem>>, %arg6: memref<8x4xbf16, #tpu.memory_space<vmem>>, %arg7: memref<8x1xf32, #tpu.memory_space<vmem>>, %arg8: memref<8x128xf32, #tpu.memory_space<vmem>>) attributes {dimension_semantics = [#tpu.dimension_semantics<parallel>], iteration_bounds = array<i64: 2>, scalar_prefetch = 0 : i64, scratch_operands = 0 : i64, tpu.core_type = #tpu.core_type<tc>, window_params = [{transform_indices = @transform_0, window_bounds = array<i64: 60, 128>}, {transform_indices = @transform_1, window_bounds = array<i64: 60, 128>}, {transform_indices = @transform_2, window_bounds = array<i64: 4, 128>}, {transform_indices = @transform_3, window_bounds = array<i64: 4, 128>}, {pipeline_mode = #tpu.pipeline_mode<synchronous>, transform_indices = @transform_4, window_bounds = array<i64: 8, 60>}, {pipeline_mode = #tpu.pipeline_mode<synchronous>, transform_indices = @transform_5, window_bounds = array<i64: 8, 4>}, {pipeline_mode = #tpu.pipeline_mode<synchronous>, transform_indices = @transform_6, window_bounds = array<i64: 8, 1>}, {transform_indices = @transform_7, window_bounds = array<i64: 8, 128>}]} {
    %c0 = arith.constant 0 : index
    %c0_0 = arith.constant 0 : index
    %0 = vector.load %arg5[%c0, %c0_0] : memref<8x60xbf16, #tpu.memory_space<vmem>>, vector<8x60xbf16>
    %c0_1 = arith.constant 0 : index
    %c0_2 = arith.constant 0 : index
    %1 = vector.load %arg6[%c0_1, %c0_2] : memref<8x4xbf16, #tpu.memory_space<vmem>>, vector<8x4xbf16>
    %c0_3 = arith.constant 0 : index
    %c0_4 = arith.constant 0 : index
    %2 = vector.load %arg1[%c0_3, %c0_4] : memref<60x128xbf16, #tpu.memory_space<vmem>>, vector<60x128xbf16>
    %cst = arith.constant dense<0.000000e+00> : vector<8x128xf32>
    %3 = tpu.matmul %0, %2, %cst {dimension_numbers = #tpu.dot_dimension_numbers<[1], [0], [0], [1], [0, 0, 1, 1], [], []>} : vector<8x60xbf16>, vector<60x128xbf16>, vector<8x128xf32> -> vector<8x128xf32>
    %c0_5 = arith.constant 0 : index
    %c0_6 = arith.constant 0 : index
    %4 = vector.load %arg3[%c0_5, %c0_6] : memref<4x128xbf16, #tpu.memory_space<vmem>>, vector<4x128xbf16>
    %cst_7 = arith.constant dense<0.000000e+00> : vector<8x128xf32>
    %5 = tpu.matmul %1, %4, %cst_7 {dimension_numbers = #tpu.dot_dimension_numbers<[1], [0], [0], [1], [0, 0, 1, 1], [], []>} : vector<8x4xbf16>, vector<4x128xbf16>, vector<8x128xf32> -> vector<8x128xf32>
    %6 = arith.addf %3, %5 : vector<8x128xf32>
    %c0_8 = arith.constant 0 : index
    %c0_9 = arith.constant 0 : index
    %7 = vector.load %arg2[%c0_8, %c0_9] : memref<60x128xbf16, #tpu.memory_space<vmem>>, vector<60x128xbf16>
    %cst_10 = arith.constant dense<0.000000e+00> : vector<8x128xf32>
    %8 = tpu.matmul %0, %7, %cst_10 {dimension_numbers = #tpu.dot_dimension_numbers<[1], [0], [0], [1], [0, 0, 1, 1], [], []>} : vector<8x60xbf16>, vector<60x128xbf16>, vector<8x128xf32> -> vector<8x128xf32>
    %c0_11 = arith.constant 0 : index
    %c0_12 = arith.constant 0 : index
    %9 = vector.load %arg4[%c0_11, %c0_12] : memref<4x128xbf16, #tpu.memory_space<vmem>>, vector<4x128xbf16>
    %cst_13 = arith.constant dense<0.000000e+00> : vector<8x128xf32>
    %10 = tpu.matmul %1, %9, %cst_13 {dimension_numbers = #tpu.dot_dimension_numbers<[1], [0], [0], [1], [0, 0, 1, 1], [], []>} : vector<8x4xbf16>, vector<4x128xbf16>, vector<8x128xf32> -> vector<8x128xf32>
    %11 = arith.addf %8, %10 : vector<8x128xf32>
    %12 = arith.maximumf %6, %11 : vector<8x128xf32>
    %c0_14 = arith.constant 0 : index
    %c0_15 = arith.constant 0 : index
    %13 = vector.load %arg7[%c0_14, %c0_15] : memref<8x1xf32, #tpu.memory_space<vmem>>, vector<8x1xf32>
    %14 = vector.broadcast %13 : vector<8x1xf32> to vector<8x128xf32>
    %15 = arith.addf %12, %14 : vector<8x128xf32>
    %cst_16 = arith.constant 0.00999999977 : f32
    %16 = vector.broadcast %cst_16 : f32 to vector<8x128xf32>
    %17 = arith.mulf %16, %15 : vector<8x128xf32>
    %18 = arith.maximumf %15, %17 : vector<8x128xf32>
    %c0_17 = arith.constant 0 : index
    %c0_18 = arith.constant 0 : index
    %19 = vector.load %arg8[%c0_17, %c0_18] : memref<8x128xf32, #tpu.memory_space<vmem>>, vector<8x128xf32>
    tpu.vector_store %arg8[%c0_17, %c0_18], %18 {strides = array<i32>} : memref<8x128xf32, #tpu.memory_space<vmem>>, vector<8x128xf32>,
    return
  }
  func.func @transform_0(%arg0: i32) -> (i32, i32) {
    %c0_i32 = arith.constant 0 : i32
    %c0_i32_0 = arith.constant 0 : i32
    return %c0_i32, %arg0 : i32, i32
  }
  func.func @transform_1(%arg0: i32) -> (i32, i32) {
    %c0_i32 = arith.constant 0 : i32
    %c0_i32_0 = arith.constant 0 : i32
    return %c0_i32, %arg0 : i32, i32
  }
  func.func @transform_2(%arg0: i32) -> (i32, i32) {
    %c0_i32 = arith.constant 0 : i32
    %c0_i32_0 = arith.constant 0 : i32
    return %c0_i32, %arg0 : i32, i32
  }
  func.func @transform_3(%arg0: i32) -> (i32, i32) {
    %c0_i32 = arith.constant 0 : i32
    %c0_i32_0 = arith.constant 0 : i32
    return %c0_i32, %arg0 : i32, i32
  }
  func.func @transform_4(%arg0: i32) -> (i32, i32) {
    %c0_i32 = arith.constant 0 : i32
    %c0_i32_0 = arith.constant 0 : i32
    %c0_i32_1 = arith.constant 0 : i32
    return %c0_i32, %c0_i32_0 : i32, i32
  }
  func.func @transform_5(%arg0: i32) -> (i32, i32) {
    %c0_i32 = arith.constant 0 : i32
    %c0_i32_0 = arith.constant 0 : i32
    %c0_i32_1 = arith.constant 0 : i32
    return %c0_i32, %c0_i32_0 : i32, i32
  }
  func.func @transform_6(%arg0: i32) -> (i32, i32) {
    %c0_i32 = arith.constant 0 : i32
    %c0_i32_0 = arith.constant 0 : i32
    %c0_i32_1 = arith.constant 0 : i32
    return %c0_i32, %c0_i32_0 : i32, i32
  }
  func.func @transform_7(%arg0: i32) -> (i32, i32) {
    %c0_i32 = arith.constant 0 : i32
    %c0_i32_0 = arith.constant 0 : i32
    return %c0_i32, %arg0 : i32, i32
  }
}

</mosaic_0001>

<llo_original>
// kernel: residual_block_forward.1
$region0: #{residual_block_forward.1}
  #allocation0 [shape = 'u32[]', space=smem, size = 0x4, offset = 0x4, fixed_abs, tag = 'smem constant byte address 0x4 - core index']
  #allocation1 [shape = 'u32[72,128]{1,0:T(1,128)}', space=vmem, size = 0x9000, scoped, tag = 'internal scratch']
  %s0 = inlined_call_operand.vmem [shape: bf16[60,256], index: 0, kind: input, shape index: {}]
  %s1 = inlined_call_operand.vmem [shape: bf16[60,256], index: 1, kind: input, shape index: {}]
  %s2 = inlined_call_operand.vmem [shape: bf16[4,256], index: 2, kind: input, shape index: {}]
  %s3 = inlined_call_operand.vmem [shape: bf16[4,256], index: 3, kind: input, shape index: {}]
  %s4 = inlined_call_operand.vmem [shape: bf16[8,60], index: 4, kind: input, shape index: {}]
  %s5 = inlined_call_operand.vmem [shape: bf16[8,4], index: 5, kind: input, shape index: {}]
  %s6 = inlined_call_operand.vmem [shape: f32[8,1], index: 6, kind: input, shape index: {}]
  %s7 = inlined_call_operand.vmem [shape: f32[8,256], index: 7, kind: output, shape index: {}]
  %s8 = sld [smem:[#allocation0]]
  $region143: #{residual_block_forward.1} parent=0
    _
  %s10 = ssub.s32 1, %s8
  %s11 = scalar_select 0, %s10, %s8
  $region1: #{residual_block_forward.1} parent=0
    #allocation2 [shape = 'u8[32768]{0}', space=vmem, size = 0x8000, scoped, tag = 'input window, operand 0']
    #allocation3 [shape = 'u8[32768]{0}', space=vmem, size = 0x8000, scoped, tag = 'input window, operand 1']
    loop: start=0, step=1, limit=4
    $region2: #{residual_block_forward.1} parent=1 // loop_pre_header
      _
    $region3: #{residual_block_forward.1} parent=1 // loop_header
      %s13 = sphi 0, %s17
      %p14 = scmp.ge.s32.totalorder %s13, 4
      %s23 = sphi 0, %s25
      %s26 = sphi 0, %s23
      %s27 = sphi 0, %s26
      %s43 = sphi 0, %s27
      %s49 = sphi 0, %s51
      %s52 = sphi 0, %s49
      %s53 = sphi 0, %s52
      %s69 = sphi 0, %s53
      %s75 = sphi 0, %s77
      %s78 = sphi 0, %s75
      %s79 = sphi 0, %s78
      %s95 = sphi 0, %s79
      %s101 = sphi 0, %s103
      %s104 = sphi 0, %s101
      %s105 = sphi 0, %s104
      %s121 = sphi 0, %s105
      %s125 = sphi 0, %s125
      %s127 = sphi 0, %s125
      %s128 = sphi 0, %s127
      %s142 = sphi 0, %s128
      %s146 = sphi 0, %s146
      %s148 = sphi 0, %s146
      %s149 = sphi 0, %s148
      %s163 = sphi 0, %s149
      %s167 = sphi 0, %s167
      %s169 = sphi 0, %s167
      %s170 = sphi 0, %s169
      %s184 = sphi 0, %s170
      %s190 = sphi 0, %s192
      %s193 = sphi 0, %s190
      %s194 = sphi 0, %s193
      %s210 = sphi 0, %s194
    $region4: #{residual_block_forward.1} parent=1 // loop_header_branch
      %16 = sbr.rel (%p14) target = $region8
    $region5: #{residual_block_forward.1} parent=1 // loop_body
      %s18 = ssub.s32 %s13, 1
      %s19 = ssub.s32 %s13, 2
      %s20 = sadd.s32 %s13, 1
      %s21 = ssub.s32 %s13, %s20
      %p22 = scmp.eq.s32.totalorder %s21, 0
      %s24 = sadd.s32 %s23, 1
      %s25 = scalar_select %p22, %s23, %s24
      %p28 = pneg %p22
      %p29 = scmp.eq.s32.totalorder %s13, 1
      %p30 = por %p28, %p29
      %p31 = scmp.ne.s32.totalorder %s23, %s26
      %p32 = scmp.eq.s32.totalorder %s13, 0
      %p33 = por %p31, %p32
      %p34 = scmp.ne.s32.totalorder %s23, %s26
      %p35 = scmp.eq.s32.totalorder %s18, 1
      %p36 = por %p34, %p35
      %p37 = scmp.ne.s32.totalorder %s26, %s27
      %p38 = scmp.eq.s32.totalorder %s18, 0
      %p39 = por %p37, %p38
      %p40 = scmp.ne.s32.totalorder %s26, %s27
      %p41 = scmp.eq.s32.totalorder %s19, 1
      %p42 = por %p40, %p41
      %p44 = scmp.ne.s32.totalorder %s27, %s43
      %p45 = scmp.eq.s32.totalorder %s19, 0
      %p46 = por %p44, %p45
      %s47 = ssub.s32 %s13, %s20
      %p48 = scmp.eq.s32.totalorder %s47, 0
      %s50 = sadd.s32 %s49, 1
      %s51 = scalar_select %p48, %s49, %s50
      %p54 = pneg %p48
      %p55 = scmp.eq.s32.totalorder %s13, 1
      %p56 = por %p54, %p55
      %p57 = scmp.ne.s32.totalorder %s49, %s52
      %p58 = scmp.eq.s32.totalorder %s13, 0
      %p59 = por %p57, %p58
      %p60 = scmp.ne.s32.totalorder %s49, %s52
      %p61 = scmp.eq.s32.totalorder %s18, 1
      %p62 = por %p60, %p61
      %p63 = scmp.ne.s32.totalorder %s52, %s53
      %p64 = scmp.eq.s32.totalorder %s18, 0
      %p65 = por %p63, %p64
      %p66 = scmp.ne.s32.totalorder %s52, %s53
      %p67 = scmp.eq.s32.totalorder %s19, 1
      %p68 = por %p66, %p67
      %p70 = scmp.ne.s32.totalorder %s53, %s69
      %p71 = scmp.eq.s32.totalorder %s19, 0
      %p72 = por %p70, %p71
      %s73 = ssub.s32 %s13, %s20
      %p74 = scmp.eq.s32.totalorder %s73, 0
      %s76 = sadd.s32 %s75, 1
      %s77 = scalar_select %p74, %s75, %s76
      %p80 = pneg %p74
      %p81 = scmp.eq.s32.totalorder %s13, 1
      %p82 = por %p80, %p81
      %p83 = scmp.ne.s32.totalorder %s75, %s78
      %p84 = scmp.eq.s32.totalorder %s13, 0
      %p85 = por %p83, %p84
      %p86 = scmp.ne.s32.totalorder %s75, %s78
      %p87 = scmp.eq.s32.totalorder %s18, 1
      %p88 = por %p86, %p87
      %p89 = scmp.ne.s32.totalorder %s78, %s79
      %p90 = scmp.eq.s32.totalorder %s18, 0
      %p91 = por %p89, %p90
      %p92 = scmp.ne.s32.totalorder %s78, %s79
      %p93 = scmp.eq.s32.totalorder %s19, 1
      %p94 = por %p92, %p93
      %p96 = scmp.ne.s32.totalorder %s79, %s95
      %p97 = scmp.eq.s32.totalorder %s19, 0
      %p98 = por %p96, %p97
      %s99 = ssub.s32 %s13, %s20
      %p100 = scmp.eq.s32.totalorder %s99, 0
      %s102 = sadd.s32 %s101, 1
      %s103 = scalar_select %p100, %s101, %s102
      %p106 = pneg %p100
      %p107 = scmp.eq.s32.totalorder %s13, 1
      %p108 = por %p106, %p107
      %p109 = scmp.ne.s32.totalorder %s101, %s104
      %p110 = scmp.eq.s32.totalorder %s13, 0
      %p111 = por %p109, %p110
      %p112 = scmp.ne.s32.totalorder %s101, %s104
      %p113 = scmp.eq.s32.totalorder %s18, 1
      %p114 = por %p112, %p113
      %p115 = scmp.ne.s32.totalorder %s104, %s105
      %p116 = scmp.eq.s32.totalorder %s18, 0
      %p117 = por %p115, %p116
      %p118 = scmp.ne.s32.totalorder %s104, %s105
      %p119 = scmp.eq.s32.totalorder %s19, 1
      %p120 = por %p118, %p119
      %p122 = scmp.ne.s32.totalorder %s105, %s121
      %p123 = scmp.eq.s32.totalorder %s19, 0
      %p124 = por %p122, %p123
      %s126 = sadd.s32 %s125, 1
      %p129 = scmp.eq.s32.totalorder %s13, 1
      %p130 = scmp.ne.s32.totalorder %s125, %s127
      %p131 = scmp.eq.s32.totalorder %s13, 0
      %p132 = por %p130, %p131
      %p133 = scmp.ne.s32.totalorder %s125, %s127
      %p134 = scmp.eq.s32.totalorder %s18, 1
      %p135 = por %p133, %p134
      %p136 = scmp.ne.s32.totalorder %s127, %s128
      %p137 = scmp.eq.s32.totalorder %s18, 0
      %p138 = por %p136, %p137
      %p139 = scmp.ne.s32.totalorder %s127, %s128
      %p140 = scmp.eq.s32.totalorder %s19, 1
      %p141 = por %p139, %p140
      %p143 = scmp.ne.s32.totalorder %s128, %s142
      %p144 = scmp.eq.s32.totalorder %s19, 0
      %p145 = por %p143, %p144
      %s147 = sadd.s32 %s146, 1
      %p150 = scmp.eq.s32.totalorder %s13, 1
      %p151 = scmp.ne.s32.totalorder %s146, %s148
      %p152 = scmp.eq.s32.totalorder %s13, 0
      %p153 = por %p151, %p152
      %p154 = scmp.ne.s32.totalorder %s146, %s148
      %p155 = scmp.eq.s32.totalorder %s18, 1
      %p156 = por %p154, %p155
      %p157 = scmp.ne.s32.totalorder %s148, %s149
      %p158 = scmp.eq.s32.totalorder %s18, 0
      %p159 = por %p157, %p158
      %p160 = scmp.ne.s32.totalorder %s148, %s149
      %p161 = scmp.eq.s32.totalorder %s19, 1
      %p162 = por %p160, %p161
      %p164 = scmp.ne.s32.totalorder %s149, %s163
      %p165 = scmp.eq.s32.totalorder %s19, 0
      %p166 = por %p164, %p165
      %s168 = sadd.s32 %s167, 1
      %p171 = scmp.eq.s32.totalorder %s13, 1
      %p172 = scmp.ne.s32.totalorder %s167, %s169
      %p173 = scmp.eq.s32.totalorder %s13, 0
      %p174 = por %p172, %p173
      %p175 = scmp.ne.s32.totalorder %s167, %s169
      %p176 = scmp.eq.s32.totalorder %s18, 1
      %p177 = por %p175, %p176
      %p178 = scmp.ne.s32.totalorder %s169, %s170
      %p179 = scmp.eq.s32.totalorder %s18, 0
      %p180 = por %p178, %p179
      %p181 = scmp.ne.s32.totalorder %s169, %s170
      %p182 = scmp.eq.s32.totalorder %s19, 1
      %p183 = por %p181, %p182
      %p185 = scmp.ne.s32.totalorder %s170, %s184
      %p186 = scmp.eq.s32.totalorder %s19, 0
      %p187 = por %p185, %p186
      %s188 = ssub.s32 %s13, %s20
      %p189 = scmp.eq.s32.totalorder %s188, 0
      %s191 = sadd.s32 %s190, 1
      %s192 = scalar_select %p189, %s190, %s191
      %p195 = pneg %p189
      %p196 = scmp.eq.s32.totalorder %s13, 1
      %p197 = por %p195, %p196
      %p198 = scmp.ne.s32.totalorder %s190, %s193
      %p199 = scmp.eq.s32.totalorder %s13, 0
      %p200 = por %p198, %p199
      %p201 = scmp.ne.s32.totalorder %s190, %s193
      %p202 = scmp.eq.s32.totalorder %s18, 1
      %p203 = por %p201, %p202
      %p204 = scmp.ne.s32.totalorder %s193, %s194
      %p205 = scmp.eq.s32.totalorder %s18, 0
      %p206 = por %p204, %p205
      %p207 = scmp.ne.s32.totalorder %s193, %s194
      %p208 = scmp.eq.s32.totalorder %s19, 1
      %p209 = por %p207, %p208
      %p211 = scmp.ne.s32.totalorder %s194, %s210
      %p212 = scmp.eq.s32.totalorder %s19, 0
      %p213 = por %p211, %p212
      %p214 = scmp.le.s32.totalorder 1, %s13
      %p215 = scmp.lt.s32.totalorder %s13, 3
      %p216 = pnand %p214, %p215
      %p217 = pneg %p216
      // Predicated region
      $region9: #{residual_block_forward.1} parent=5 // pred_check
        _
      $region10: #{residual_block_forward.1} parent=5 // pred_check_branch
        %219 = sbr.rel (%p216) target = $region12
      $region11: #{residual_block_forward.1} parent=5 // pred_region
        %s220 = ssub.s32 %s13, 1
        // Predicated region
        $region13: #{residual_block_forward.1} parent=11 // pred_check
          %p221 = pneg %p138
        $region14: #{residual_block_forward.1} parent=11 // pred_check_branch
          %223 = sbr.rel (%p221) target = $region16
        $region15: #{residual_block_forward.1} parent=11 // pred_region
          _
        $region16: #{residual_block_forward.1} parent=11 // pred_fallthru
          _
        // Predicated region
        $region17: #{residual_block_forward.1} parent=11 // pred_check
          %p224 = pneg %p159
        $region18: #{residual_block_forward.1} parent=11 // pred_check_branch
          %226 = sbr.rel (%p224) target = $region20
        $region19: #{residual_block_forward.1} parent=11 // pred_region
          _
        $region20: #{residual_block_forward.1} parent=11 // pred_fallthru
          _
        // Predicated region
        $region21: #{residual_block_forward.1} parent=11 // pred_check
          %p227 = pneg %p180
        $region22: #{residual_block_forward.1} parent=11 // pred_check_branch
          %229 = sbr.rel (%p227) target = $region24
        $region23: #{residual_block_forward.1} parent=11 // pred_region
          _
        $region24: #{residual_block_forward.1} parent=11 // pred_fallthru
          _
      $region12: #{residual_block_forward.1} parent=5 // pred_fallthru
        _
      %p230 = scmp.lt.s32.totalorder %s13, 2
      // Predicated region
      $region25: #{residual_block_forward.1} parent=5 // pred_check
        %p231 = pneg %p230
      $region26: #{residual_block_forward.1} parent=5 // pred_check_branch
        %233 = sbr.rel (%p231) target = $region28
      $region27: #{residual_block_forward.1} parent=5 // pred_region
        // Predicated region
        $region29: #{residual_block_forward.1} parent=27 // pred_check
          %p234 = pneg %p33
        $region30: #{residual_block_forward.1} parent=27 // pred_check_branch
          %236 = sbr.rel (%p234) target = $region32
        $region31: #{residual_block_forward.1} parent=27 // pred_region
          %s237 = sand.u32 %s23, 1
          %s238 = sand.u32 %s23, 1
          %s239 = smul.addr %s238, 32
          %s240 = scalar_lea.vmem [#allocation2], %s239
          %s241 = smul.addr %s13, 4
          %s242 = scalar_lea.vmem %s0, %s241
          // Predicated region
          $region33: #{residual_block_forward.1} parent=31 // pred_check
            _
          $region34: #{residual_block_forward.1} parent=31 // pred_check_branch
            %244 = sbr.rel (0) target = $region36
          $region35: #{residual_block_forward.1} parent=31 // pred_region
            // Predicated region
            $region37: #{residual_block_forward.1} parent=35 // pred_check
              _
            $region38: #{residual_block_forward.1} parent=35 // pred_check_branch
              %246 = sbr.rel target = $region40
            $region39: #{residual_block_forward.1} parent=35 // pred_region
              // Predicated region
              $region52: #{residual_block_forward.1} parent=39 // pred_check
                _
              $region53: #{residual_block_forward.1} parent=39 // pred_check_branch
                %276 = sbr.rel (0) target = $region55
              $region54: #{residual_block_forward.1} parent=39 // pred_region
                loop: start=0, step=1, limit=1
                $region56: #{residual_block_forward.1} parent=54 // loop_pre_header
                  _
                $region57: #{residual_block_forward.1} parent=54 // loop_header
                  %s278 = sphi 0, %s282
                  %p279 = scmp.ge.s32.totalorder %s278, 1
                  %s283 = sphi %s242, %s242
                  %s284 = sphi %s240, %s240
                $region58: #{residual_block_forward.1} parent=54 // loop_header_branch
                  %281 = sbr.rel (%p279) target = $region62
                $region59: #{residual_block_forward.1} parent=54 // loop_body
                  _
                $region60: #{residual_block_forward.1} parent=54 // loop_footer
                  %s282 = sadd.s32 1, %s278
                $region61: #{residual_block_forward.1} parent=54 // loop_footer_branch
                  %277 = sbr.rel target = $region57
                $region62: #{residual_block_forward.1} parent=54 // loop_exit
                  _
                %s286 = ssub.s32 16, 1
                loop: start=0, step=1, limit=1
                $region63: #{residual_block_forward.1} parent=54 // loop_pre_header
                  _
                $region64: #{residual_block_forward.1} parent=54 // loop_header
                  %s288 = sphi 0, %s292
                  %p289 = scmp.ge.s32.totalorder %s288, 1
                  %s293 = sphi %s242, %s242
                  %s294 = sphi %s240, %s240
                $region65: #{residual_block_forward.1} parent=54 // loop_header_branch
                  %291 = sbr.rel (%p289) target = $region69
                $region66: #{residual_block_forward.1} parent=54 // loop_body
                  %v295 = vld [vmem:[%s293] sm:%s286]
                  %296 = vst [vmem:[%s294] sm:%s286] %v295
                  %v297 = vld [vmem:[%s293 + $0x8] sm:%s286]
                  %298 = vst [vmem:[%s294 + $0x4] sm:%s286] %v297
                  %v299 = vld [vmem:[%s293 + $0x10] sm:%s286]
                  %300 = vst [vmem:[%s294 + $0x8] sm:%s286] %v299
                  %v301 = vld [vmem:[%s293 + $0x18] sm:%s286]
                  %302 = vst [vmem:[%s294 + $0xc] sm:%s286] %v301
                  %v303 = vld [vmem:[%s293 + $0x20] sm:%s286]
                  %304 = vst [vmem:[%s294 + $0x10] sm:%s286] %v303
                  %v305 = vld [vmem:[%s293 + $0x28] sm:%s286]
                  %306 = vst [vmem:[%s294 + $0x14] sm:%s286] %v305
                  %v307 = vld [vmem:[%s293 + $0x30] sm:%s286]
                  %308 = vst [vmem:[%s294 + $0x18] sm:%s286] %v307
                  %v309 = vld [vmem:[%s293 + $0x38] sm:%s286]
                  %310 = vst [vmem:[%s294 + $0x1c] sm:%s286] %v309
                $region67: #{residual_block_forward.1} parent=54 // loop_footer
                  %s292 = sadd.s32 1, %s288
                $region68: #{residual_block_forward.1} parent=54 // loop_footer_branch
                  %287 = sbr.rel target = $region64
                $region69: #{residual_block_forward.1} parent=54 // loop_exit
                  _
              $region55: #{residual_block_forward.1} parent=39 // pred_fallthru
                _
            $region40: #{residual_block_forward.1} parent=35 // pred_fallthru
              _
            // Predicated region
            $region41: #{residual_block_forward.1} parent=35 // pred_check
              _
            $region42: #{residual_block_forward.1} parent=35 // pred_check_branch
              %248 = sbr.rel (0) target = $region44
            $region43: #{residual_block_forward.1} parent=35 // pred_region
              %s250 = ssub.s32 16, 1
              loop: start=0, step=1, limit=1
              $region45: #{residual_block_forward.1} parent=43 // loop_pre_header
                _
              $region46: #{residual_block_forward.1} parent=43 // loop_header
                %s252 = sphi 0, %s256
                %p253 = scmp.ge.s32.totalorder %s252, 1
                %s257 = sphi %s242, %s242
                %s258 = sphi %s240, %s240
              $region47: #{residual_block_forward.1} parent=43 // loop_header_branch
                %255 = sbr.rel (%p253) target = $region51
              $region48: #{residual_block_forward.1} parent=43 // loop_body
                %v259 = vld [vmem:[%s257] sm:%s250]
                %260 = vst [vmem:[%s258] sm:%s250] %v259
                %v261 = vld [vmem:[%s257 + $0x8] sm:%s250]
                %262 = vst [vmem:[%s258 + $0x4] sm:%s250] %v261
                %v263 = vld [vmem:[%s257 + $0x10] sm:%s250]
                %264 = vst [vmem:[%s258 + $0x8] sm:%s250] %v263
                %v265 = vld [vmem:[%s257 + $0x18] sm:%s250]
                %266 = vst [vmem:[%s258 + $0xc] sm:%s250] %v265
                %v267 = vld [vmem:[%s257 + $0x20] sm:%s250]
                %268 = vst [vmem:[%s258 + $0x10] sm:%s250] %v267
                %v269 = vld [vmem:[%s257 + $0x28] sm:%s250]
                %270 = vst [vmem:[%s258 + $0x14] sm:%s250] %v269
                %v271 = vld [vmem:[%s257 + $0x30] sm:%s250]
                %272 = vst [vmem:[%s258 + $0x18] sm:%s250] %v271
                %v273 = vld [vmem:[%s257 + $0x38] sm:%s250]
                %274 = vst [vmem:[%s258 + $0x1c] sm:%s250] %v273
              $region49: #{residual_block_forward.1} parent=43 // loop_footer
                %s256 = sadd.s32 1, %s252
              $region50: #{residual_block_forward.1} parent=43 // loop_footer_branch
                %251 = sbr.rel target = $region46
              $region51: #{residual_block_forward.1} parent=43 // loop_exit
                _
            $region44: #{residual_block_forward.1} parent=35 // pred_fallthru
              _
          $region36: #{residual_block_forward.1} parent=31 // pred_fallthru
            _
          %311 = vnop
        $region32: #{residual_block_forward.1} parent=27 // pred_fallthru
          _
        // Predicated region
        $region70: #{residual_block_forward.1} parent=27 // pred_check
          %p312 = pneg %p59
        $region71: #{residual_block_forward.1} parent=27 // pred_check_branch
          %314 = sbr.rel (%p312) target = $region73
        $region72: #{residual_block_forward.1} parent=27 // pred_region
          %s315 = sand.u32 %s49, 1
          %s316 = sand.u32 %s49, 1
          %s317 = smul.addr %s316, 32
          %s318 = scalar_lea.vmem [#allocation3], %s317
          %s319 = smul.addr %s13, 4
          %s320 = scalar_lea.vmem %s1, %s319
          // Predicated region
          $region74: #{residual_block_forward.1} parent=72 // pred_check
            _
          $region75: #{residual_block_forward.1} parent=72 // pred_check_branch
            %322 = sbr.rel (0) target = $region77
          $region76: #{residual_block_forward.1} parent=72 // pred_region
            // Predicated region
            $region78: #{residual_block_forward.1} parent=76 // pred_check
              _
            $region79: #{residual_block_forward.1} parent=76 // pred_check_branch
              %324 = sbr.rel target = $region81
            $region80: #{residual_block_forward.1} parent=76 // pred_region
              // Predicated region
              $region93: #{residual_block_forward.1} parent=80 // pred_check
                _
              $region94: #{residual_block_forward.1} parent=80 // pred_check_branch
                %354 = sbr.rel (0) target = $region96
              $region95: #{residual_block_forward.1} parent=80 // pred_region
                loop: start=0, step=1, limit=1
                $region97: #{residual_block_forward.1} parent=95 // loop_pre_header
                  _
                $region98: #{residual_block_forward.1} parent=95 // loop_header
                  %s356 = sphi 0, %s360
                  %p357 = scmp.ge.s32.totalorder %s356, 1
                  %s361 = sphi %s320, %s320
                  %s362 = sphi %s318, %s318
                $region99: #{residual_block_forward.1} parent=95 // loop_header_branch
                  %359 = sbr.rel (%p357) target = $region103
                $region100: #{residual_block_forward.1} parent=95 // loop_body
                  _
                $region101: #{residual_block_forward.1} parent=95 // loop_footer
                  %s360 = sadd.s32 1, %s356
                $region102: #{residual_block_forward.1} parent=95 // loop_footer_branch
                  %355 = sbr.rel target = $region98
                $region103: #{residual_block_forward.1} parent=95 // loop_exit
                  _
                %s364 = ssub.s32 16, 1
                loop: start=0, step=1, limit=1
                $region104: #{residual_block_forward.1} parent=95 // loop_pre_header
                  _
                $region105: #{residual_block_forward.1} parent=95 // loop_header
                  %s366 = sphi 0, %s370
                  %p367 = scmp.ge.s32.totalorder %s366, 1
                  %s371 = sphi %s320, %s320
                  %s372 = sphi %s318, %s318
                $region106: #{residual_block_forward.1} parent=95 // loop_header_branch
                  %369 = sbr.rel (%p367) target = $region110
                $region107: #{residual_block_forward.1} parent=95 // loop_body
                  %v373 = vld [vmem:[%s371] sm:%s364]
                  %374 = vst [vmem:[%s372] sm:%s364] %v373
                  %v375 = vld [vmem:[%s371 + $0x8] sm:%s364]
                  %376 = vst [vmem:[%s372 + $0x4] sm:%s364] %v375
                  %v377 = vld [vmem:[%s371 + $0x10] sm:%s364]
                  %378 = vst [vmem:[%s372 + $0x8] sm:%s364] %v377
                  %v379 = vld [vmem:[%s371 + $0x18] sm:%s364]
                  %380 = vst [vmem:[%s372 + $0xc] sm:%s364] %v379
                  %v381 = vld [vmem:[%s371 + $0x20] sm:%s364]
                  %382 = vst [vmem:[%s372 + $0x10] sm:%s364] %v381
                  %v383 = vld [vmem:[%s371 + $0x28] sm:%s364]
                  %384 = vst [vmem:[%s372 + $0x14] sm:%s364] %v383
                  %v385 = vld [vmem:[%s371 + $0x30] sm:%s364]
                  %386 = vst [vmem:[%s372 + $0x18] sm:%s364] %v385
                  %v387 = vld [vmem:[%s371 + $0x38] sm:%s364]
                  %388 = vst [vmem:[%s372 + $0x1c] sm:%s364] %v387
                $region108: #{residual_block_forward.1} parent=95 // loop_footer
                  %s370 = sadd.s32 1, %s366
                $region109: #{residual_block_forward.1} parent=95 // loop_footer_branch
                  %365 = sbr.rel target = $region105
                $region110: #{residual_block_forward.1} parent=95 // loop_exit
                  _
              $region96: #{residual_block_forward.1} parent=80 // pred_fallthru
                _
            $region81: #{residual_block_forward.1} parent=76 // pred_fallthru
              _
            // Predicated region
            $region82: #{residual_block_forward.1} parent=76 // pred_check
              _
            $region83: #{residual_block_forward.1} parent=76 // pred_check_branch
              %326 = sbr.rel (0) target = $region85
            $region84: #{residual_block_forward.1} parent=76 // pred_region
              %s328 = ssub.s32 16, 1
              loop: start=0, step=1, limit=1
              $region86: #{residual_block_forward.1} parent=84 // loop_pre_header
                _
              $region87: #{residual_block_forward.1} parent=84 // loop_header
                %s330 = sphi 0, %s334
                %p331 = scmp.ge.s32.totalorder %s330, 1
                %s335 = sphi %s320, %s320
                %s336 = sphi %s318, %s318
              $region88: #{residual_block_forward.1} parent=84 // loop_header_branch
                %333 = sbr.rel (%p331) target = $region92
              $region89: #{residual_block_forward.1} parent=84 // loop_body
                %v337 = vld [vmem:[%s335] sm:%s328]
                %338 = vst [vmem:[%s336] sm:%s328] %v337
                %v339 = vld [vmem:[%s335 + $0x8] sm:%s328]
                %340 = vst [vmem:[%s336 + $0x4] sm:%s328] %v339
                %v341 = vld [vmem:[%s335 + $0x10] sm:%s328]
                %342 = vst [vmem:[%s336 + $0x8] sm:%s328] %v341
                %v343 = vld [vmem:[%s335 + $0x18] sm:%s328]
                %344 = vst [vmem:[%s336 + $0xc] sm:%s328] %v343
                %v345 = vld [vmem:[%s335 + $0x20] sm:%s328]
                %346 = vst [vmem:[%s336 + $0x10] sm:%s328] %v345
                %v347 = vld [vmem:[%s335 + $0x28] sm:%s328]
                %348 = vst [vmem:[%s336 + $0x14] sm:%s328] %v347
                %v349 = vld [vmem:[%s335 + $0x30] sm:%s328]
                %350 = vst [vmem:[%s336 + $0x18] sm:%s328] %v349
                %v351 = vld [vmem:[%s335 + $0x38] sm:%s328]
                %352 = vst [vmem:[%s336 + $0x1c] sm:%s328] %v351
              $region90: #{residual_block_forward.1} parent=84 // loop_footer
                %s334 = sadd.s32 1, %s330
              $region91: #{residual_block_forward.1} parent=84 // loop_footer_branch
                %329 = sbr.rel target = $region87
              $region92: #{residual_block_forward.1} parent=84 // loop_exit
                _
            $region85: #{residual_block_forward.1} parent=76 // pred_fallthru
              _
          $region77: #{residual_block_forward.1} parent=72 // pred_fallthru
            _
          %389 = vnop
        $region73: #{residual_block_forward.1} parent=27 // pred_fallthru
          _
        // Predicated region
        $region111: #{residual_block_forward.1} parent=27 // pred_check
          %p390 = pneg %p85
        $region112: #{residual_block_forward.1} parent=27 // pred_check_branch
          %392 = sbr.rel (%p390) target = $region114
        $region113: #{residual_block_forward.1} parent=27 // pred_region
          %p393 = scmp.lt.s32.totalorder %s13, 1
          %s394 = scalar_select %p393, %s13, 1
          %s395 = smul.addr %s394, 2
          %s396 = scalar_lea.vmem %s2, %s395
        $region114: #{residual_block_forward.1} parent=27 // pred_fallthru
          _
        // Predicated region
        $region115: #{residual_block_forward.1} parent=27 // pred_check
          %p397 = pneg %p111
        $region116: #{residual_block_forward.1} parent=27 // pred_check_branch
          %399 = sbr.rel (%p397) target = $region118
        $region117: #{residual_block_forward.1} parent=27 // pred_region
          %p400 = scmp.lt.s32.totalorder %s13, 1
          %s401 = scalar_select %p400, %s13, 1
          %s402 = smul.addr %s401, 2
          %s403 = scalar_lea.vmem %s3, %s402
        $region118: #{residual_block_forward.1} parent=27 // pred_fallthru
          _
      $region28: #{residual_block_forward.1} parent=5 // pred_fallthru
        _
      %p404 = scmp.le.s32.totalorder 1, %s13
      %p405 = scmp.lt.s32.totalorder %s13, 3
      %p406 = pnand %p404, %p405
      %p407 = pneg %p406
      // Predicated region
      $region119: #{residual_block_forward.1} parent=5 // pred_check
        _
      $region120: #{residual_block_forward.1} parent=5 // pred_check_branch
        %409 = sbr.rel (%p406) target = $region122
      $region121: #{residual_block_forward.1} parent=5 // pred_region
        %s410 = ssub.s32 %s13, 1
        %s411 = sand.u32 %s26, 1
        %s412 = sand.u32 %s26, 1
        %s413 = smul.addr %s412, 32
        %s414 = scalar_lea.vmem [#allocation2], %s413
        // Predicated region
        $region123: #{residual_block_forward.1} parent=121 // pred_check
          %p415 = pneg %p39
        $region124: #{residual_block_forward.1} parent=121 // pred_check_branch
          %417 = sbr.rel (%p415) target = $region126
        $region125: #{residual_block_forward.1} parent=121 // pred_region
          _
        $region126: #{residual_block_forward.1} parent=121 // pred_fallthru
          _
        %s418 = sand.u32 %s52, 1
        %s419 = sand.u32 %s52, 1
        %s420 = smul.addr %s419, 32
        %s421 = scalar_lea.vmem [#allocation3], %s420
        // Predicated region
        $region127: #{residual_block_forward.1} parent=121 // pred_check
          %p422 = pneg %p65
        $region128: #{residual_block_forward.1} parent=121 // pred_check_branch
          %424 = sbr.rel (%p422) target = $region130
        $region129: #{residual_block_forward.1} parent=121 // pred_region
          _
        $region130: #{residual_block_forward.1} parent=121 // pred_fallthru
          _
        %s425 = sand.u32 %s26, 1
        %s426 = sand.u32 %s26, 1
        %s427 = smul.addr %s426, 32
        %s428 = scalar_lea.vmem [#allocation2], %s427
        %p429 = pneg %p39
        %p430 = pneg %p36
        %s431 = sand.u32 %s52, 1
        %s432 = sand.u32 %s52, 1
        %s433 = smul.addr %s432, 32
        %s434 = scalar_lea.vmem [#allocation3], %s433
        %p435 = pneg %p65
        %p436 = pneg %p62
        %p437 = scmp.lt.s32.totalorder %s18, 1
        %s438 = scalar_select %p437, %s18, 1
        %s439 = smul.addr %s438, 2
        %s440 = scalar_lea.vmem %s2, %s439
        %p441 = pneg %p91
        %p442 = pneg %p88
        %p443 = scmp.lt.s32.totalorder %s18, 1
        %s444 = scalar_select %p443, %s18, 1
        %s445 = smul.addr %s444, 2
        %s446 = scalar_lea.vmem %s3, %s445
        %p447 = pneg %p117
        %p448 = pneg %p114
        %p449 = pneg %p138
        %p450 = pneg %p135
        %p451 = pneg %p159
        %p452 = pneg %p156
        %p453 = pneg %p180
        %p454 = pneg %p177
        %p455 = pneg %p206
        %p456 = pneg %p203
        %p457 = scmp.lt.s32.totalorder %s18, 1
        %s458 = scalar_select %p457, %s18, 1
        %s459 = smul.addr %s458, 8
        %s460 = scalar_lea.vmem %s7, %s459
        %p461 = scmp.lt.s32.totalorder %s18, 1
        %s462 = scalar_select %p461, %s18, 1
        %s463 = smul.addr %s462, 2
        %s464 = scalar_lea.vmem %s2, %s463
        %p465 = scmp.lt.s32.totalorder %s18, 1
        %s466 = scalar_select %p465, %s18, 1
        %s467 = smul.addr %s466, 2
        %s468 = scalar_lea.vmem %s3, %s467
        %p469 = scmp.lt.s32.totalorder %s18, 1
        %s470 = scalar_select %p469, %s18, 1
        %s471 = smul.addr %s470, 8
        %s472 = scalar_lea.vmem %s7, %s471
        %v474 = vld [vmem:[%s4] sm:$0xf]
        %v475 = vld [vmem:[%s5] sm:$0xf]
        %v476 = vld [vmem:[%s414] sm:$0xf]
        %v477 = vld [vmem:[%s414 + $0x4] sm:$0xf]
        %v478 = vld [vmem:[%s414 + $0x8] sm:$0xf]
        %v479 = vld [vmem:[%s414 + $0xc] sm:$0xf]
        %v480 = vld [vmem:[%s414 + $0x10] sm:$0xf]
        %v481 = vld [vmem:[%s414 + $0x14] sm:$0xf]
        %v482 = vld [vmem:[%s414 + $0x18] sm:$0xf]
        %v483 = vld [vmem:[%s414 + $0x1c] sm:$0x3]
        %v484 = vld [vmem:[%s464] sm:$0x3]
        %vm485 = vcmask 31744
        %v487 = vsel %vm485, %v475, 0
        %vm489 = vcmask 1041408
        %v491 = vsel %vm489, %v484, 0
        %493 = vmatpush.bf16.msra.mxu0 0
        %494 = vmatpush.bf16.msra.mxu0 0
        %495 = vmatpush.bf16.msra.mxu0 0
        %496 = vmatpush.bf16.msra.mxu0 0
        %497 = vmatpush.bf16.msra.mxu0 0
        %498 = vmatpush.bf16.msra.mxu0 0
        %499 = vmatpush.bf16.msra.mxu0 0
        %500 = vmatpush.bf16.msra.mxu0 %v491
        %501 = vmatmul.bf16.gmra.mxu0 %v487
        %v502 = vpop.f32.mrf.mxu0
        %v503 = vadd.f32 0.0, %v502
        %v504 = vpop.f32.mrf.mxu0
        %505 = vdwg.mxu0
        %v514 = vunpack.c.l.b16 %v476
        %v515 = vunpack.c.l.b16 %v477
        %v516 = vunpack.c.l.b16 %v478
        %v517 = vunpack.c.l.b16 %v479
        %v518 = vunpack.c.l.b16 %v480
        %v519 = vunpack.c.l.b16 %v481
        %v520 = vunpack.c.l.b16 %v482
        %v521 = vunpack.c.l.b16 %v483
        %v522 = vpack.c.b16 %v515, %v514
        %v523 = vpack.c.b16 %v517, %v516
        %v524 = vpack.c.b16 %v519, %v518
        %v525 = vpack.c.b16 %v521, %v520
        %vm529 = vcmask 490496
        %v531 = vsel %vm529, %v474, 0
        %vm533 = vcmask 1045504
        %v535 = vsel %vm533, %v525, 0
        %537 = vmatpush.bf16.msra.mxu0 0
        %538 = vmatpush.bf16.msra.mxu0 0
        %539 = vmatpush.bf16.msra.mxu0 0
        %540 = vmatpush.bf16.msra.mxu0 0
        %541 = vmatpush.bf16.msra.mxu0 %v535
        %542 = vmatpush.bf16.msra.mxu0 %v524
        %543 = vmatpush.bf16.msra.mxu0 %v523
        %544 = vmatpush.bf16.msra.mxu0 %v522
        %545 = vmatmul.bf16.gmra.mxu0 %v531
        %v546 = vpop.f32.mrf.mxu0
        %v547 = vadd.f32 %v503, %v546
        %v548 = vpop.f32.mrf.mxu0
        %549 = vdwg.mxu0
        %v550 = vld [vmem:[%s421] sm:$0xf]
        %v551 = vld [vmem:[%s421 + $0x4] sm:$0xf]
        %v552 = vld [vmem:[%s421 + $0x8] sm:$0xf]
        %v553 = vld [vmem:[%s421 + $0xc] sm:$0xf]
        %v554 = vld [vmem:[%s421 + $0x10] sm:$0xf]
        %v555 = vld [vmem:[%s421 + $0x14] sm:$0xf]
        %v556 = vld [vmem:[%s421 + $0x18] sm:$0xf]
        %v557 = vld [vmem:[%s421 + $0x1c] sm:$0x3]
        %v558 = vld [vmem:[%s468] sm:$0x3]
        %v560 = vsel %vm489, %v558, 0
        %562 = vmatpush.bf16.msra.mxu0 0
        %563 = vmatpush.bf16.msra.mxu0 0
        %564 = vmatpush.bf16.msra.mxu0 0
        %565 = vmatpush.bf16.msra.mxu0 0
        %566 = vmatpush.bf16.msra.mxu0 0
        %567 = vmatpush.bf16.msra.mxu0 0
        %568 = vmatpush.bf16.msra.mxu0 0
        %569 = vmatpush.bf16.msra.mxu0 %v560
        %570 = vmatmul.bf16.gmra.mxu0 %v487
        %v571 = vpop.f32.mrf.mxu0
        %v572 = vadd.f32 0.0, %v571
        %v573 = vpop.f32.mrf.mxu0
        %574 = vdwg.mxu0
        %v583 = vunpack.c.l.b16 %v550
        %v584 = vunpack.c.l.b16 %v551
        %v585 = vunpack.c.l.b16 %v552
        %v586 = vunpack.c.l.b16 %v553
        %v587 = vunpack.c.l.b16 %v554
        %v588 = vunpack.c.l.b16 %v555
        %v589 = vunpack.c.l.b16 %v556
        %v590 = vunpack.c.l.b16 %v557
        %v591 = vpack.c.b16 %v584, %v583
        %v592 = vpack.c.b16 %v586, %v585
        %v593 = vpack.c.b16 %v588, %v587
        %v594 = vpack.c.b16 %v590, %v589
        %v599 = vsel %vm533, %v594, 0
        %601 = vmatpush.bf16.msra.mxu0 0
        %602 = vmatpush.bf16.msra.mxu0 0
        %603 = vmatpush.bf16.msra.mxu0 0
        %604 = vmatpush.bf16.msra.mxu0 0
        %605 = vmatpush.bf16.msra.mxu0 %v599
        %606 = vmatpush.bf16.msra.mxu0 %v593
        %607 = vmatpush.bf16.msra.mxu0 %v592
        %608 = vmatpush.bf16.msra.mxu0 %v591
        %609 = vmatmul.bf16.gmra.mxu0 %v531
        %v610 = vpop.f32.mrf.mxu0
        %v611 = vadd.f32 %v572, %v610
        %v612 = vpop.f32.mrf.mxu0
        %613 = vdwg.mxu0
        %v614 = vmax.f32 %v547, %v611
        %v615 = vld [vmem:[%s6] sm:$0xff]
        %617 = vset.pattern.permute.xlu0 0
        %618 = vperm.xlu0 %617, %v615
        %v619 = vpop.permute.xlu0 %618
        %v621 = vadd.f32 %v614, %v619
        %v622 = vmul.f32 %v621, 0.01
        %v623 = vmax.f32 %v621, %v622
        %624 = vst [vmem:[%s472] sm:$0xff] %v623
        %p625 = scmp.lt.s32.totalorder %s18, 1
        %s626 = scalar_select %p625, %s18, 1
        %s627 = smul.addr %s626, 8
        %s628 = scalar_lea.vmem %s7, %s627
        // Predicated region
        $region131: #{residual_block_forward.1} parent=121 // pred_check
          %p629 = pneg %p203
        $region132: #{residual_block_forward.1} parent=121 // pred_check_branch
          %631 = sbr.rel (%p629) target = $region134
        $region133: #{residual_block_forward.1} parent=121 // pred_region
          _
        $region134: #{residual_block_forward.1} parent=121 // pred_fallthru
          _
      $region122: #{residual_block_forward.1} parent=5 // pred_fallthru
        _
      %p632 = scmp.le.s32.totalorder 2, %s13
      // Predicated region
      $region135: #{residual_block_forward.1} parent=5 // pred_check
        %p633 = pneg %p632
      $region136: #{residual_block_forward.1} parent=5 // pred_check_branch
        %635 = sbr.rel (%p633) target = $region138
      $region137: #{residual_block_forward.1} parent=5 // pred_region
        %s636 = ssub.s32 %s13, 2
        // Predicated region
        $region139: #{residual_block_forward.1} parent=137 // pred_check
          %p637 = pneg %p209
        $region140: #{residual_block_forward.1} parent=137 // pred_check_branch
          %639 = sbr.rel (%p637) target = $region142
        $region141: #{residual_block_forward.1} parent=137 // pred_region
          %p640 = scmp.lt.s32.totalorder %s19, 1
          %s641 = scalar_select %p640, %s19, 1
          %s642 = smul.addr %s641, 8
          %s643 = scalar_lea.vmem %s7, %s642
        $region142: #{residual_block_forward.1} parent=137 // pred_fallthru
          _
      $region138: #{residual_block_forward.1} parent=5 // pred_fallthru
        _
    $region6: #{residual_block_forward.1} parent=1 // loop_footer
      %s17 = sadd.s32 1, %s13
    $region7: #{residual_block_forward.1} parent=1 // loop_footer_branch
      %12 = sbr.rel target = $region3
    $region8: #{residual_block_forward.1} parent=1 // loop_exit
      _

</llo_original>
